<compile_context>
chip_gen: v7x
topology: tpu7x:2x2x1
jax: 0.10.0
libtpu: 0.0.40
codegen_flags: <defaults>
</compile_context>

<pallas_src>
import functools

import jax
import jax.numpy as jnp
from jax.experimental import pallas as pl
from jax.experimental.pallas import tpu as pltpu


def _lsr_row_loss_kernel(x_ref, t_ref, loss_ref, *, e: float, inv_cm1: float):
    x = x_ref[...].astype(jnp.float32)      # [TB, C] logits (upcast in VMEM)
    t = t_ref[...]                          # [TB, 1] int32 labels
    tb, c = x.shape

    # Numerically stable log-partition: logZ = m + log(sum(exp(x - m)))
    m = jnp.max(x, axis=1, keepdims=True)                              # [TB, 1]
    lse = jnp.log(jnp.sum(jnp.exp(x - m), axis=1, keepdims=True))      # [TB, 1]
    log_z = m + lse                                                    # [TB, 1]

    # Single fused weighted reduce (replaces separate x_t and row_sum passes):
    #   w_j = e/(C-1) + (1-e)*[j == target]
    #   combined = sum_j w_j * x_j = (1-e)*x_t + e/(C-1)*sum_j x_j
    col = jax.lax.broadcasted_iota(jnp.int32, (tb, c), 1)
    w = inv_cm1 + (1.0 - e) * (col == t).astype(jnp.float32)           # [TB, C]
    combined = jnp.sum(w * x, axis=1, keepdims=True)                   # [TB, 1]

    # loss = -[combined - ((1-e) + C*e/(C-1)) * logZ]
    coef = (1.0 - e) + inv_cm1 * c
    loss_ref[...] = -(combined - coef * log_z)                         # [TB, 1] f32


def _vmem_limit_bytes() -> int:
    """Generation-aware scoped-VMEM limit: 3/4 of physical VMEM per core."""
    try:
        cap = int(pltpu.get_tpu_info().vmem_capacity_bytes)
    except Exception:
        cap = 64 * 1024 * 1024   # conservative default (v7x-sized)
    return max(32 * 1024 * 1024, (cap * 3) // 4)


def _choose_tb(b: int, c: int, itemsize: int, vmem_limit_bytes: int) -> int:
    """Largest batch tile (multiple of 8) whose live VMEM footprint fits the budget.

    Accounts for:
      * (8,128) layout padding of the class dim,
      * 2x double-buffering of the native-dtype input block,
      * ~3 f32-sized elementwise temporaries from the in-kernel upcast/compute.
    """
    c_pad = ((c + 127) // 128) * 128
    live_per_row = c_pad * (2 * itemsize + 3 * 4)
    budget = vmem_limit_bytes // 2            # headroom for labels/output/regalloc
    rows = max(8, (budget // max(1, live_per_row)) // 8 * 8)
    # Cap at the batch (floored to a multiple of 8) so typical batches only ever
    # produce the standard "ragged last block" case.
    b_cap = max(8, (b // 8) * 8)
    return int(min(rows, b_cap))


def lsr_loss(x: jax.Array, target: jax.Array, e: float = 0.1, reduction: str = "mean"):
    """Pallas implementation of LSR.forward(x, target)."""
    if x.ndim != 2:
        raise ValueError(f"Only 2 dimension tensor are implemented, (got {x.shape})")
    if x.shape[0] != target.shape[0]:
        raise ValueError(
            "Expected input batchsize ({}) to match target batch_size({})".format(
                x.shape[0], target.shape[0]))
    if reduction not in ("none", "sum", "mean"):
        raise ValueError("unrecognized option, expect reduction to be one of none, mean, sum")

    b, c = x.shape
    if c < 2:
        raise ValueError("label smoothing needs at least 2 classes (C >= 2)")

    # NOTE: out-of-range / ignore-index labels (e.g. -100) are not supported;
    # the masked weight silently treats them as "no target class".
    t2d = target.astype(jnp.int32).reshape(b, 1)

    vmem_limit = _vmem_limit_bytes()
    tb = _choose_tb(b, c, x.dtype.itemsize, vmem_limit)
    grid = (pl.cdiv(b, tb),)   # ragged last block; no full-array jnp.pad copy

    kernel = functools.partial(
        _lsr_row_loss_kernel, e=float(e), inv_cm1=float(e) / float(c - 1))

    loss = pl.pallas_call(
        kernel,
        out_shape=jax.ShapeDtypeStruct((b, 1), jnp.float32),
        grid=grid,
        in_specs=[
            pl.BlockSpec((tb, c), lambda i: (i, 0)),   # x logits, native dtype
            pl.BlockSpec((tb, 1), lambda i: (i, 0)),   # int32 labels
        ],
        out_specs=pl.BlockSpec((tb, 1), lambda i: (i, 0)),   # per-row loss
        compiler_params=pltpu.CompilerParams(
            dimension_semantics=("parallel",),         # batch axis -> both TCs on v7x
            vmem_limit_bytes=vmem_limit,
        ),
    )(x, t2d)

    loss = loss[:b, 0]            # drop any padded/ragged tail rows
    if reduction == "none":
        return loss
    if reduction == "sum":
        return jnp.sum(loss)
    return jnp.sum(loss) / b      # mean


def _lsr_reference(x, target, e=0.1, reduction="mean"):
    b, c = x.shape
    one_hot = jax.nn.one_hot(target, c, dtype=jnp.float32)
    smoothed = one_hot * (1.0 - e) + e / (c - 1)
    logp = jax.nn.log_softmax(x.astype(jnp.float32), axis=1)
    loss = jnp.sum(-logp * smoothed, axis=1)
    if reduction == "none":
        return loss
    if reduction == "sum":
        return jnp.sum(loss)
    return jnp.mean(loss)


if __name__ == "__main__":
    key = jax.random.PRNGKey(0)
    kx, kt = jax.random.split(key)

    # Small shapes consistent with the module: batch=8, classes=32.
    B, C = 8, 32
    x = jax.random.normal(kx, (B, C), dtype=jnp.float32)
    target = jax.random.randint(kt, (B,), 0, C, dtype=jnp.int32)

    for red in ("mean", "sum", "none"):
        out = jax.block_until_ready(lsr_loss(x, target, e=0.1, reduction=red))
        ref = _lsr_reference(x, target, e=0.1, reduction=red)
        assert jnp.allclose(out, ref, atol=1e-5, rtol=1e-5), (red, out, ref)

    # Ragged batch (not a multiple of the tile) exercises the cdiv grid /
    # padded last block path (no jnp.pad of the logits).
    B2 = 10
    x2 = jax.random.normal(kx, (B2, C), dtype=jnp.float32)
    t2 = jax.random.randint(kt, (B2,), 0, C, dtype=jnp.int32)
    out2 = jax.block_until_ready(lsr_loss(x2, t2, e=0.1, reduction="none"))
    ref2 = _lsr_reference(x2, t2, e=0.1, reduction="none")
    assert jnp.allclose(out2, ref2, atol=1e-5, rtol=1e-5), (out2, ref2)

    # bf16 logits are DMA'd as bf16 and upcast in-kernel (memory-bound path).
    xb = x.astype(jnp.bfloat16)
    out_bf = jax.block_until_ready(lsr_loss(xb, target, e=0.1, reduction="mean"))
    ref_bf = _lsr_reference(xb, target, e=0.1, reduction="mean")
    assert jnp.allclose(out_bf, ref_bf, atol=2e-2, rtol=2e-2), (out_bf, ref_bf)

    print("KERNEL_OK")
</pallas_src>

<mosaic_0001>
module attributes {stable_mosaic.version = 11 : i64} {
  func.func @_lsr_row_loss_kernel(%arg0: i32, %arg1: memref<8x32xf32, #tpu.memory_space<vmem>>, %arg2: memref<8x1xi32, #tpu.memory_space<vmem>>, %arg3: memref<8x1xf32, #tpu.memory_space<vmem>>) attributes {dimension_semantics = [#tpu.dimension_semantics<parallel>], iteration_bounds = array<i64: 1>, scalar_prefetch = 0 : i64, scratch_operands = 0 : i64, tpu.core_type = #tpu.core_type<tc>, window_params = [{transform_indices = @transform_0, window_bounds = array<i64: 8, 32>}, {transform_indices = @transform_1, window_bounds = array<i64: 8, 1>}, {transform_indices = @transform_2, window_bounds = array<i64: 8, 1>}]} {
    %c0 = arith.constant 0 : index
    %c0_0 = arith.constant 0 : index
    %0 = vector.load %arg1[%c0, %c0_0] : memref<8x32xf32, #tpu.memory_space<vmem>>, vector<8x32xf32>
    %c0_1 = arith.constant 0 : index
    %c0_2 = arith.constant 0 : index
    %1 = vector.load %arg2[%c0_1, %c0_2] : memref<8x1xi32, #tpu.memory_space<vmem>>, vector<8x1xi32>
    %cst = arith.constant dense<0xFF800000> : vector<8xf32>
    %2 = vector.multi_reduction <maximumf>, %0, %cst [1] : vector<8x32xf32> to vector<8xf32>
    %3 = vector.shape_cast %2 : vector<8xf32> to vector<8x1xf32>
    %4 = vector.broadcast %3 : vector<8x1xf32> to vector<8x32xf32>
    %5 = arith.subf %0, %4 : vector<8x32xf32>
    %6 = math.exp %5 : vector<8x32xf32>
    %cst_3 = arith.constant dense<0.000000e+00> : vector<8xf32>
    %7 = vector.multi_reduction <add>, %6, %cst_3 [1] : vector<8x32xf32> to vector<8xf32>
    %8 = vector.shape_cast %7 : vector<8xf32> to vector<8x1xf32>
    %9 = math.log %8 : vector<8x1xf32>
    %10 = arith.addf %3, %9 : vector<8x1xf32>
    %11 = tpu.iota {dimensions = array<i32: 1>} : vector<8x32xi32>
    %12 = vector.broadcast %1 : vector<8x1xi32> to vector<8x32xi32>
    %13 = arith.cmpi eq, %11, %12 : vector<8x32xi32>
    %14 = arith.extui %13 : vector<8x32xi1> to vector<8x32xi32>
    %15 = arith.sitofp %14 : vector<8x32xi32> to vector<8x32xf32>
    %cst_4 = arith.constant 0.899999976 : f32
    %16 = vector.broadcast %cst_4 : f32 to vector<8x32xf32>
    %17 = arith.mulf %16, %15 : vector<8x32xf32>
    %cst_5 = arith.constant 0.0032258064 : f32
    %18 = vector.broadcast %cst_5 : f32 to vector<8x32xf32>
    %19 = arith.addf %18, %17 : vector<8x32xf32>
    %20 = arith.mulf %19, %0 : vector<8x32xf32>
    %cst_6 = arith.constant dense<0.000000e+00> : vector<8xf32>
    %21 = vector.multi_reduction <add>, %20, %cst_6 [1] : vector<8x32xf32> to vector<8xf32>
    %22 = vector.shape_cast %21 : vector<8xf32> to vector<8x1xf32>
    %cst_7 = arith.constant 1.0032258 : f32
    %23 = vector.broadcast %cst_7 : f32 to vector<8x1xf32>
    %24 = arith.mulf %23, %10 : vector<8x1xf32>
    %25 = arith.subf %22, %24 : vector<8x1xf32>
    %cst_8 = arith.constant 0.000000e+00 : f32
    %26 = vector.broadcast %cst_8 : f32 to vector<8x1xf32>
    %27 = arith.subf %26, %25 : vector<8x1xf32>
    %c0_9 = arith.constant 0 : index
    %c0_10 = arith.constant 0 : index
    %28 = vector.load %arg3[%c0_9, %c0_10] : memref<8x1xf32, #tpu.memory_space<vmem>>, vector<8x1xf32>
    tpu.vector_store %arg3[%c0_9, %c0_10], %27 {strides = array<i32>} : memref<8x1xf32, #tpu.memory_space<vmem>>, vector<8x1xf32>,
    return
  }
  func.func @transform_0(%arg0: i32) -> (i32, i32) {
    %c0_i32 = arith.constant 0 : i32
    %c0_i32_0 = arith.constant 0 : i32
    return %arg0, %c0_i32 : i32, i32
  }
  func.func @transform_1(%arg0: i32) -> (i32, i32) {
    %c0_i32 = arith.constant 0 : i32
    %c0_i32_0 = arith.constant 0 : i32
    return %arg0, %c0_i32 : i32, i32
  }
  func.func @transform_2(%arg0: i32) -> (i32, i32) {
    %c0_i32 = arith.constant 0 : i32
    %c0_i32_0 = arith.constant 0 : i32
    return %arg0, %c0_i32 : i32, i32
  }
}

</mosaic_0001>

<llo_original>
// kernel: tpu_custom_call.1
$region0: #{tpu_custom_call.1}
  #allocation0 [shape = 'u32[]', space=smem, size = 0x4, offset = 0x4, fixed_abs, tag = 'smem constant byte address 0x4 - core index']
  #allocation1 [shape = 'u32[144,128]{1,0:T(1,128)}', space=vmem, size = 0x12000, scoped, tag = 'internal scratch']
  %s0 = inlined_call_operand.vmem [shape: f32[8,32], index: 0, kind: input, shape index: {}]
  %s1 = inlined_call_operand.vmem [shape: s32[8,1], index: 1, kind: input, shape index: {}]
  %s2 = inlined_call_operand.vmem [shape: f32[8,1], index: 2, kind: output, shape index: {}]
  %s3 = sld [smem:[#allocation0]]
  $region18: #{tpu_custom_call.1} parent=0
    _
  %s5 = ssub.s32 1, %s3
  %s6 = scalar_select 0, %s5, %s3
  // Predicated region
  $region2: #{tpu_custom_call.1} parent=0 // pred_check
    _
  $region3: #{tpu_custom_call.1} parent=0 // pred_check_branch
    %8 = sbr.rel (0) target = $region5
  $region4: #{tpu_custom_call.1} parent=0 // pred_region
    _
  $region5: #{tpu_custom_call.1} parent=0 // pred_fallthru
    _
  // Predicated region
  $region6: #{tpu_custom_call.1} parent=0 // pred_check
    _
  $region7: #{tpu_custom_call.1} parent=0 // pred_check_branch
    %10 = sbr.rel (0) target = $region9
  $region8: #{tpu_custom_call.1} parent=0 // pred_region
    _
  $region9: #{tpu_custom_call.1} parent=0 // pred_fallthru
    _
  %v11 = vld [vmem:[%s0] sm:$0xff]
  %v12 = vld [vmem:[%s1] sm:$0xff]
  %vm13 = vcmask 261120
  %v14 = vsel %vm13, %v11, -inf
  %15 = vmax.xlane.f32.xlu0 %v14
  %v16 = vpop.xlane.xlu0 %15
  %v17 = vsub.f32 %v11, %v16
  %v18 = vmul.f32 %v17, 1.442695
  %v19 = vpow.pop %v18
  %v20 = vsel %vm13, %v19, 0.0
  %21 = vadd.xlane.f32.xlu0 %v20
  %v22 = vpop.xlane.xlu0 %21
  %v23 = vlog2.pop %v22
  %v24 = vmul.f32 %v23, 0.6931472
  %v25 = vadd.f32 %v16, %v24
  %v26 = vlaneseq
  %v27 = vand.u32 %v26, 127
  %28 = vset.pattern.permute.xlu0 0
  %29 = vperm.xlu0 %28, %v12
  %v30 = vpop.permute.xlu0 %29
  %vm31 = vcmp.eq.s32.totalorder %v27, %v30
  %v32 = vsel %vm31, 1, 0
  %v33 = vcvt.s32.f32 %v32
  %v34 = vmul.f32 %v33, 0.9
  %v35 = vadd.f32 %v34, 0.0032258064
  %v36 = vmul.f32 %v35, %v11
  %v37 = vsel %vm13, %v36, 0.0
  %38 = vadd.xlane.f32.xlu0 %v37
  %v39 = vpop.xlane.xlu0 %38
  %v40 = vmul.f32 %v25, 1.0032258
  %v41 = vsub.f32 %v39, %v40
  %v42 = vsub.f32 0.0, %v41
  %vm43 = vcmask 7168
  %44 = vst.msk [vmem:[%s2] sm:$0xff] %vm43, %v42
  // Predicated region
  $region10: #{tpu_custom_call.1} parent=0 // pred_check
    _
  $region11: #{tpu_custom_call.1} parent=0 // pred_check_branch
    %46 = sbr.rel (0) target = $region13
  $region12: #{tpu_custom_call.1} parent=0 // pred_region
    _
  $region13: #{tpu_custom_call.1} parent=0 // pred_fallthru
    _
  // Predicated region
  $region14: #{tpu_custom_call.1} parent=0 // pred_check
    _
  $region15: #{tpu_custom_call.1} parent=0 // pred_check_branch
    %48 = sbr.rel (0) target = $region17
  $region16: #{tpu_custom_call.1} parent=0 // pred_region
    _
  $region17: #{tpu_custom_call.1} parent=0 // pred_fallthru
    _

</llo_original>
